<compile_context>
chip_gen: v7x
topology: tpu7x:2x2x1
jax: 0.10.0
libtpu: 0.0.40
codegen_flags: <defaults>
</compile_context>

<pallas_src>
import math

import jax
import jax.numpy as jnp
import numpy as np
from jax.experimental import pallas as pl
from jax.experimental.pallas import tpu as pltpu


NEG_SLOPE = 0.01          # nn.LeakyReLU default
_UNROLL_MID_MAX = 4       # static-unroll mid layers up to this depth


def _round_up(x, m):
    return (x + m - 1) // m * m


def _leaky(h):
    return jnp.where(h >= 0, h, NEG_SLOPE * h)


# ----------------------------------------------------------------------------
# Fused Pallas kernel: one grid step = (one window, one batch tile), full MLP.
# ----------------------------------------------------------------------------
def make_fused_kernel(n_mid, use_bf16_mxu):
    cast = (lambda v: v.astype(jnp.bfloat16)) if use_bf16_mxu else (lambda v: v)

    def kernel(x_ref, oh_ref, w0_ref, wcs_ref, b0_ref, *rest):
        if n_mid > 0:
            wmid_ref, bmid_ref, wlast_ref, blast_ref, out_ref = rest
        else:
            wlast_ref, blast_ref, out_ref = rest

        # layer 0: geno @ W0_geno + one_hot(label|super) @ W0_clsup + b0
        bias = (jnp.dot(oh_ref[...], wcs_ref[0],
                        preferred_element_type=jnp.float32) + b0_ref[0])
        h = jnp.dot(x_ref[0], w0_ref[0],
                    preferred_element_type=jnp.float32) + bias
        h = _leaky(h)

        if 0 < n_mid <= _UNROLL_MID_MAX:
            for l in range(n_mid):                 # static unroll (small depth)
                h = _leaky(jnp.dot(cast(h), wmid_ref[0, l],
                                   preferred_element_type=jnp.float32)
                           + bmid_ref[0, l])
        elif n_mid > _UNROLL_MID_MAX:
            def mid(l, hh):                        # bounded live ranges for deep nets
                return _leaky(jnp.dot(cast(hh), wmid_ref[0, l],
                                      preferred_element_type=jnp.float32)
                              + bmid_ref[0, l])
            h = jax.lax.fori_loop(0, n_mid, mid, h)

        out = jnp.dot(cast(h), wlast_ref[0],
                      preferred_element_type=jnp.float32) + blast_ref[0]
        out_ref[0] = out.astype(out_ref.dtype)

    return kernel


def _vmem_limit_bytes():
    try:
        cap = int(pltpu.get_tpu_info().vmem_capacity_bytes)
    except Exception:
        cap = 64 * 1024 * 1024        # conservative fallback (v7x-sized)
    return int(min(cap * 3 // 4, 100 * 1024 * 1024))


def fused_windowed_mlp_call(x_all, oh, packed, *, b_blk, n_mid, use_bf16_mxu,
                            vmem_limit):
    Wn, B_pad, ws_pad = x_all.shape
    cs_pad = oh.shape[-1]
    hid_pad = packed['w0'].shape[-1]
    out_pad = packed['wlast'].shape[-1]

    w0, wcs, b0 = packed['w0'], packed['wcs'], packed['b0']
    wmid, bmid = packed['wmid'], packed['bmid']
    wlast, blast = packed['wlast'], packed['blast']

    if use_bf16_mxu:
        # bf16 MXU operands, f32 accumulation (biases stay f32).
        x_all = x_all.astype(jnp.bfloat16)
        oh = oh.astype(jnp.bfloat16)
        w0 = w0.astype(jnp.bfloat16)
        wcs = wcs.astype(jnp.bfloat16)
        wlast = wlast.astype(jnp.bfloat16)
        if n_mid > 0:
            wmid = wmid.astype(jnp.bfloat16)

    inputs = [x_all, oh, w0, wcs, b0]
    in_specs = [
        # activations / one-hot: vary with (window, batch tile) resp. batch only
        pl.BlockSpec((1, b_blk, ws_pad),    lambda w, b: (w, b, 0)),
        pl.BlockSpec((b_blk, cs_pad),       lambda w, b: (b, 0)),
        # weights / biases: depend on window only (VMEM-resident across B tiles)
        pl.BlockSpec((1, ws_pad, hid_pad),  lambda w, b: (w, 0, 0)),
        pl.BlockSpec((1, cs_pad, hid_pad),  lambda w, b: (w, 0, 0)),
        pl.BlockSpec((1, 1, hid_pad),       lambda w, b: (w, 0, 0)),
    ]
    if n_mid > 0:
        n_mid_arr = wmid.shape[1]
        inputs += [wmid, bmid]
        in_specs += [
            pl.BlockSpec((1, n_mid_arr, hid_pad, hid_pad),
                         lambda w, b: (w, 0, 0, 0)),
            pl.BlockSpec((1, n_mid_arr, 1, hid_pad),
                         lambda w, b: (w, 0, 0, 0)),
        ]
    inputs += [wlast, blast]
    in_specs += [
        pl.BlockSpec((1, hid_pad, out_pad), lambda w, b: (w, 0, 0)),
        pl.BlockSpec((1, 1, out_pad),       lambda w, b: (w, 0, 0)),
    ]

    kernel = make_fused_kernel(n_mid, use_bf16_mxu)
    grid = (Wn, B_pad // b_blk)        # window axis outer -> weights stay resident

    return pl.pallas_call(
        kernel,
        out_shape=jax.ShapeDtypeStruct((Wn, B_pad, out_pad), jnp.float32),
        grid_spec=pltpu.PrefetchScalarGridSpec(
            num_scalar_prefetch=0,
            grid=grid,
            in_specs=in_specs,
            out_specs=pl.BlockSpec((1, b_blk, out_pad), lambda w, b: (w, b, 0)),
        ),
        compiler_params=pltpu.CompilerParams(
            dimension_semantics=("parallel", "parallel"),
            vmem_limit_bytes=vmem_limit,
        ),
    )(*inputs)


# ----------------------------------------------------------------------------
# Parameter packing: stack all windows (both passes) into 128-aligned arrays.
# ----------------------------------------------------------------------------
def pack_windowed_params(all_params, win_sizes, num_classes, num_super_classes):
    Wn = len(all_params)
    C, S = num_classes, num_super_classes
    num_layers = len(all_params[0])
    n_mid = num_layers - 2
    n_mid_arr = max(n_mid, 1)

    ws_pad = _round_up(max(win_sizes), 128)
    hid_pad = _round_up(max(ws // 2 for ws in win_sizes), 128)
    out_pad = ws_pad                      # lane-dense output slab width
    cs_pad = _round_up(C + S, 8)

    w0 = np.zeros((Wn, ws_pad, hid_pad), np.float32)
    wcs = np.zeros((Wn, cs_pad, hid_pad), np.float32)
    b0 = np.zeros((Wn, 1, hid_pad), np.float32)
    wmid = np.zeros((Wn, n_mid_arr, hid_pad, hid_pad), np.float32)
    bmid = np.zeros((Wn, n_mid_arr, 1, hid_pad), np.float32)
    wlast = np.zeros((Wn, hid_pad, out_pad), np.float32)
    blast = np.zeros((Wn, 1, out_pad), np.float32)

    for i, (params, ws) in enumerate(zip(all_params, win_sizes)):
        hid = ws // 2
        W0, bb = np.asarray(params[0][0]), np.asarray(params[0][1])
        assert W0.shape == (ws + C + S, hid), (W0.shape, ws, hid)
        w0[i, :ws, :hid] = W0[:ws]
        wcs[i, :C + S, :hid] = W0[ws:]
        b0[i, 0, :hid] = bb
        for l in range(n_mid):
            Wl, bl = np.asarray(params[1 + l][0]), np.asarray(params[1 + l][1])
            wmid[i, l, :hid, :hid] = Wl
            bmid[i, l, 0, :hid] = bl
        WL, bL = np.asarray(params[-1][0]), np.asarray(params[-1][1])
        wlast[i, :hid, :ws] = WL
        blast[i, 0, :ws] = bL

    arrs = dict(w0=w0, wcs=wcs, b0=b0, wmid=wmid, bmid=bmid,
                wlast=wlast, blast=blast)
    dims = dict(ws_pad=ws_pad, hid_pad=hid_pad, out_pad=out_pad,
                cs_pad=cs_pad, n_mid=n_mid)
    return {k: jnp.asarray(v) for k, v in arrs.items()}, dims


# ----------------------------------------------------------------------------
# Deterministic parameter init (same layer shapes as nn.Linear in MLP)
# ----------------------------------------------------------------------------
def init_mlp_params(key, in_size, out_size, hidden_size, num_layers):
    sizes = [in_size] + [hidden_size] * (num_layers - 1) + [out_size]
    params = []
    for l in range(num_layers):
        key, kw, kb = jax.random.split(key, 3)
        fan_in = max(sizes[l], 1)
        bound = 1.0 / math.sqrt(fan_in)
        w = jax.random.uniform(kw, (sizes[l], sizes[l + 1]), jnp.float32, -bound, bound)
        b = jax.random.uniform(kb, (sizes[l + 1],), jnp.float32, -bound, bound)
        params.append((w, b))
    return params, key


def build_windowed_mlp_params(key, total_size, window_size, num_layers,
                              num_classes, num_super_classes):
    mlps = []
    num_models = math.ceil(total_size / window_size)
    for i in range(num_models):
        ws = total_size % window_size if i == num_models - 1 else window_size
        p, key = init_mlp_params(key, ws + num_classes + num_super_classes,
                                 ws, ws // 2, num_layers)
        mlps.append(p)
    overlap = []
    num_models = math.ceil((total_size - window_size // 2) / window_size) + 1
    for i in range(num_models):
        if i == 0:
            ws = window_size // 2
        elif i == num_models - 1:
            ws = (total_size - window_size // 2) % window_size
        else:
            ws = window_size
        p, key = init_mlp_params(key, ws + num_classes + num_super_classes,
                                 ws, ws // 2, num_layers)
        overlap.append(p)
    return mlps, overlap
# TODO(synk): configs where a window size formula yields 0 (e.g. total % window == 0)
# create zero-width Linear layers in the PyTorch module too; not supported here.


# ----------------------------------------------------------------------------
# WindowedMLP forward (fused Pallas path)
# ----------------------------------------------------------------------------
def split_like_torch(x, size, axis=1):
    n = x.shape[axis]
    chunks, start = [], 0
    while start < n:
        end = min(start + size, n)
        chunks.append(jax.lax.slice_in_dim(x, start, end, axis=axis))
        start = end
    return chunks


def windowed_mlp_forward_pallas(genotypes, labels, super_labels, *,
                                window_size, num_classes, num_super_classes,
                                mlps_params, overlap_params, use_bf16_mxu=False):
    B, _ = genotypes.shape
    half = window_size // 2

    slices1 = split_like_torch(genotypes, window_size)
    slices2 = [genotypes[:, :half]] + split_like_torch(genotypes[:, half:], window_size)
    # mirror torch's zip() truncation semantics
    n1 = min(len(slices1), len(mlps_params))
    n2 = min(len(slices2), len(overlap_params))
    slices1, slices2 = slices1[:n1], slices2[:n2]
    all_slices = slices1 + slices2
    all_params = list(mlps_params)[:n1] + list(overlap_params)[:n2]
    win_sizes = [s.shape[1] for s in all_slices]

    packed, dims = pack_windowed_params(all_params, win_sizes,
                                        num_classes, num_super_classes)
    ws_pad, hid_pad = dims['ws_pad'], dims['hid_pad']
    out_pad, cs_pad, n_mid = dims['out_pad'], dims['cs_pad'], dims['n_mid']

    # --- batch tile selection under an explicit VMEM budget -----------------
    mult = 16 if use_bf16_mxu else 8
    isz = 2 if use_bf16_mxu else 4
    vmem_limit = _vmem_limit_bytes()
    b_blk = min(512, _round_up(B, mult))

    w_bytes = ((ws_pad + cs_pad + n_mid * hid_pad + out_pad) * hid_pad * isz
               + (1 + n_mid) * hid_pad * 4 + out_pad * 4)

    def working_set(bb):
        act = bb * (ws_pad + cs_pad) * isz + bb * out_pad * 4 + 2 * bb * hid_pad * 4
        return 2 * (w_bytes + act)         # everything double-buffered

    while b_blk > mult and working_set(b_blk) > int(vmem_limit * 0.85):
        b_blk = _round_up(max(mult, b_blk // 2), mult)
    # TODO(synk): very large windows (hid_pad >= ~4096) need a hidden/out tiling
    # grid axis (or single-buffered weight BlockSpecs) to fit v7x's 64 MiB VMEM.

    B_pad = _round_up(B, b_blk)

    # stacked, zero-padded genotype windows: [num_windows, B_pad, ws_pad]
    x_all = jnp.stack(
        [jnp.pad(s.astype(jnp.float32),
                 ((0, B_pad - B), (0, ws_pad - s.shape[1])))
         for s in all_slices], axis=0)

    # one-hot(label) | one-hot(super): [B_pad, cs_pad]; layer-0 uses it in-kernel,
    # so no [Wn, B_pad, hid] bias stream is ever materialized in HBM.
    oh = jnp.concatenate(
        [jax.nn.one_hot(labels, num_classes, dtype=jnp.float32),
         jax.nn.one_hot(super_labels, num_super_classes, dtype=jnp.float32)], axis=1)
    oh = jnp.pad(oh, ((0, B_pad - B),
                      (0, cs_pad - (num_classes + num_super_classes))))

    out_all = fused_windowed_mlp_call(
        x_all, oh, packed, b_blk=b_blk, n_mid=n_mid,
        use_bf16_mxu=use_bf16_mxu, vmem_limit=vmem_limit)

    recon1 = jnp.concatenate(
        [out_all[i, :B, :win_sizes[i]] for i in range(n1)], axis=1)
    recon2 = jnp.concatenate(
        [out_all[n1 + j, :B, :win_sizes[n1 + j]] for j in range(n2)], axis=1)
    return recon1 + recon2


# ----------------------------------------------------------------------------
# Pure-JAX reference (mirrors the PyTorch module directly) for correctness check
# ----------------------------------------------------------------------------
def mlp_forward_ref(x, params):
    h = x.astype(jnp.float32)
    for l, (w, b) in enumerate(params):
        h = h @ w + b
        if l < len(params) - 1:
            h = jnp.where(h >= 0, h, NEG_SLOPE * h)
    return h


def windowed_mlp_forward_ref(genotypes, labels, super_labels, *,
                             window_size, num_classes, num_super_classes,
                             mlps_params, overlap_params):
    oh_label = jax.nn.one_hot(labels, num_classes, dtype=genotypes.dtype)
    oh_super = jax.nn.one_hot(super_labels, num_super_classes, dtype=genotypes.dtype)

    recon = []
    for g_i, params in zip(split_like_torch(genotypes, window_size), mlps_params):
        x = jnp.concatenate([g_i, oh_label, oh_super], axis=1)
        recon.append(mlp_forward_ref(x, params))
    recon = jnp.concatenate(recon, axis=1)

    half = window_size // 2
    chunks = [genotypes[:, :half]] + split_like_torch(genotypes[:, half:], window_size)
    recon_ov = []
    for g_i, params in zip(chunks, overlap_params):
        x = jnp.concatenate([g_i, oh_label, oh_super], axis=1)
        recon_ov.append(mlp_forward_ref(x, params))
    recon_ov = jnp.concatenate(recon_ov, axis=1)
    return recon + recon_ov


if __name__ == "__main__":
    B = 2
    total_size = 22
    window_size = 8
    num_layers = 3
    num_classes = 4
    num_super_classes = 3

    key = jax.random.PRNGKey(0)
    k_param, k_gen, k_lab, k_slab = jax.random.split(key, 4)

    mlps_params, overlap_params = build_windowed_mlp_params(
        k_param, total_size, window_size, num_layers, num_classes, num_super_classes)

    genotypes = jax.random.normal(k_gen, (B, total_size), dtype=jnp.float32)
    labels = jax.random.randint(k_lab, (B,), 0, num_classes, dtype=jnp.int32)
    super_labels = jax.random.randint(k_slab, (B,), 0, num_super_classes, dtype=jnp.int32)

    ref = windowed_mlp_forward_ref(
        genotypes, labels, super_labels,
        window_size=window_size, num_classes=num_classes,
        num_super_classes=num_super_classes,
        mlps_params=mlps_params, overlap_params=overlap_params)
    ref = jax.block_until_ready(ref)

    # f32 MXU path: tight tolerance.
    out = windowed_mlp_forward_pallas(
        genotypes, labels, super_labels,
        window_size=window_size, num_classes=num_classes,
        num_super_classes=num_super_classes,
        mlps_params=mlps_params, overlap_params=overlap_params,
        use_bf16_mxu=False)
    out = jax.block_until_ready(out)
    assert out.shape == (B, total_size)
    np.testing.assert_allclose(np.asarray(out), np.asarray(ref), rtol=2e-5, atol=2e-5)

    # bf16-operand / f32-accumulate MXU path: loose tolerance.
    out_bf16 = windowed_mlp_forward_pallas(
        genotypes, labels, super_labels,
        window_size=window_size, num_classes=num_classes,
        num_super_classes=num_super_classes,
        mlps_params=mlps_params, overlap_params=overlap_params,
        use_bf16_mxu=True)
    out_bf16 = jax.block_until_ready(out_bf16)
    np.testing.assert_allclose(np.asarray(out_bf16), np.asarray(ref),
                               rtol=1e-1, atol=1e-1)

    print("KERNEL_OK")
</pallas_src>

<mosaic_0001>
module attributes {stable_mosaic.version = 11 : i64} {
  func.func @kernel(%arg0: i32, %arg1: i32, %arg2: memref<1x8x128xf32, #tpu.memory_space<vmem>>, %arg3: memref<8x8xf32, #tpu.memory_space<vmem>>, %arg4: memref<1x128x128xf32, #tpu.memory_space<vmem>>, %arg5: memref<1x8x128xf32, #tpu.memory_space<vmem>>, %arg6: memref<1x1x128xf32, #tpu.memory_space<vmem>>, %arg7: memref<1x1x128x128xf32, #tpu.memory_space<vmem>>, %arg8: memref<1x1x1x128xf32, #tpu.memory_space<vmem>>, %arg9: memref<1x128x128xf32, #tpu.memory_space<vmem>>, %arg10: memref<1x1x128xf32, #tpu.memory_space<vmem>>, %arg11: memref<1x8x128xf32, #tpu.memory_space<vmem>>) attributes {dimension_semantics = [#tpu.dimension_semantics<parallel>, #tpu.dimension_semantics<parallel>], iteration_bounds = array<i64: 7, 1>, scalar_prefetch = 0 : i64, scratch_operands = 0 : i64, tpu.core_type = #tpu.core_type<tc>, window_params = [{transform_indices = @transform_0, window_bounds = array<i64: 1, 8, 128>}, {transform_indices = @transform_1, window_bounds = array<i64: 8, 8>}, {transform_indices = @transform_2, window_bounds = array<i64: 1, 128, 128>}, {transform_indices = @transform_3, window_bounds = array<i64: 1, 8, 128>}, {transform_indices = @transform_4, window_bounds = array<i64: 1, 1, 128>}, {transform_indices = @transform_5, window_bounds = array<i64: 1, 1, 128, 128>}, {transform_indices = @transform_6, window_bounds = array<i64: 1, 1, 1, 128>}, {transform_indices = @transform_7, window_bounds = array<i64: 1, 128, 128>}, {transform_indices = @transform_8, window_bounds = array<i64: 1, 1, 128>}, {transform_indices = @transform_9, window_bounds = array<i64: 1, 8, 128>}]} {
    %c0 = arith.constant 0 : index
    %c0_0 = arith.constant 0 : index
    %0 = vector.load %arg3[%c0, %c0_0] : memref<8x8xf32, #tpu.memory_space<vmem>>, vector<8x8xf32>
    %c0_1 = arith.constant 0 : index
    %c0_2 = arith.constant 0 : index
    %c0_3 = arith.constant 0 : index
    %1 = vector.load %arg5[%c0_1, %c0_2, %c0_3] : memref<1x8x128xf32, #tpu.memory_space<vmem>>, vector<1x8x128xf32>
    %2 = vector.shape_cast %1 : vector<1x8x128xf32> to vector<8x128xf32>
    %cst = arith.constant dense<0.000000e+00> : vector<8x128xf32>
    %3 = tpu.matmul %0, %2, %cst {dimension_numbers = #tpu.dot_dimension_numbers<[1], [0], [0], [1], [0, 0, 1, 1], [], []>} : vector<8x8xf32>, vector<8x128xf32>, vector<8x128xf32> -> vector<8x128xf32>
    %c0_4 = arith.constant 0 : index
    %c0_5 = arith.constant 0 : index
    %c0_6 = arith.constant 0 : index
    %4 = vector.load %arg6[%c0_4, %c0_5, %c0_6] : memref<1x1x128xf32, #tpu.memory_space<vmem>>, vector<1x1x128xf32>
    %5 = vector.shape_cast %4 : vector<1x1x128xf32> to vector<1x128xf32>
    %6 = vector.broadcast %5 : vector<1x128xf32> to vector<8x128xf32>
    %7 = arith.addf %3, %6 : vector<8x128xf32>
    %c0_7 = arith.constant 0 : index
    %c0_8 = arith.constant 0 : index
    %c0_9 = arith.constant 0 : index
    %8 = vector.load %arg2[%c0_7, %c0_8, %c0_9] : memref<1x8x128xf32, #tpu.memory_space<vmem>>, vector<1x8x128xf32>
    %9 = vector.shape_cast %8 : vector<1x8x128xf32> to vector<8x128xf32>
    %c0_10 = arith.constant 0 : index
    %c0_11 = arith.constant 0 : index
    %c0_12 = arith.constant 0 : index
    %10 = vector.load %arg4[%c0_10, %c0_11, %c0_12] : memref<1x128x128xf32, #tpu.memory_space<vmem>>, vector<1x128x128xf32>
    %11 = vector.shape_cast %10 : vector<1x128x128xf32> to vector<128x128xf32>
    %cst_13 = arith.constant dense<0.000000e+00> : vector<8x128xf32>
    %12 = tpu.matmul %9, %11, %cst_13 {dimension_numbers = #tpu.dot_dimension_numbers<[1], [0], [0], [1], [0, 0, 1, 1], [], []>} : vector<8x128xf32>, vector<128x128xf32>, vector<8x128xf32> -> vector<8x128xf32>
    %13 = arith.addf %12, %7 : vector<8x128xf32>
    %cst_14 = arith.constant 0.000000e+00 : f32
    %14 = vector.broadcast %cst_14 : f32 to vector<8x128xf32>
    %15 = arith.cmpf oge, %13, %14 : vector<8x128xf32>
    %cst_15 = arith.constant 0.00999999977 : f32
    %16 = vector.broadcast %cst_15 : f32 to vector<8x128xf32>
    %17 = arith.mulf %16, %13 : vector<8x128xf32>
    %18 = arith.select %15, %13, %17 : vector<8x128xi1>, vector<8x128xf32>
    %c0_16 = arith.constant 0 : index
    %c0_17 = arith.constant 0 : index
    %c0_18 = arith.constant 0 : index
    %c0_19 = arith.constant 0 : index
    %19 = vector.load %arg7[%c0_16, %c0_17, %c0_18, %c0_19] : memref<1x1x128x128xf32, #tpu.memory_space<vmem>>, vector<1x1x128x128xf32>
    %20 = vector.shape_cast %19 : vector<1x1x128x128xf32> to vector<128x128xf32>
    %cst_20 = arith.constant dense<0.000000e+00> : vector<8x128xf32>
    %21 = tpu.matmul %18, %20, %cst_20 {dimension_numbers = #tpu.dot_dimension_numbers<[1], [0], [0], [1], [0, 0, 1, 1], [], []>} : vector<8x128xf32>, vector<128x128xf32>, vector<8x128xf32> -> vector<8x128xf32>
    %c0_21 = arith.constant 0 : index
    %c0_22 = arith.constant 0 : index
    %c0_23 = arith.constant 0 : index
    %c0_24 = arith.constant 0 : index
    %22 = vector.load %arg8[%c0_21, %c0_22, %c0_23, %c0_24] : memref<1x1x1x128xf32, #tpu.memory_space<vmem>>, vector<1x1x1x128xf32>
    %23 = vector.shape_cast %22 : vector<1x1x1x128xf32> to vector<1x128xf32>
    %24 = vector.broadcast %23 : vector<1x128xf32> to vector<8x128xf32>
    %25 = arith.addf %21, %24 : vector<8x128xf32>
    %cst_25 = arith.constant 0.000000e+00 : f32
    %26 = vector.broadcast %cst_25 : f32 to vector<8x128xf32>
    %27 = arith.cmpf oge, %25, %26 : vector<8x128xf32>
    %cst_26 = arith.constant 0.00999999977 : f32
    %28 = vector.broadcast %cst_26 : f32 to vector<8x128xf32>
    %29 = arith.mulf %28, %25 : vector<8x128xf32>
    %30 = arith.select %27, %25, %29 : vector<8x128xi1>, vector<8x128xf32>
    %c0_27 = arith.constant 0 : index
    %c0_28 = arith.constant 0 : index
    %c0_29 = arith.constant 0 : index
    %31 = vector.load %arg9[%c0_27, %c0_28, %c0_29] : memref<1x128x128xf32, #tpu.memory_space<vmem>>, vector<1x128x128xf32>
    %32 = vector.shape_cast %31 : vector<1x128x128xf32> to vector<128x128xf32>
    %cst_30 = arith.constant dense<0.000000e+00> : vector<8x128xf32>
    %33 = tpu.matmul %30, %32, %cst_30 {dimension_numbers = #tpu.dot_dimension_numbers<[1], [0], [0], [1], [0, 0, 1, 1], [], []>} : vector<8x128xf32>, vector<128x128xf32>, vector<8x128xf32> -> vector<8x128xf32>
    %c0_31 = arith.constant 0 : index
    %c0_32 = arith.constant 0 : index
    %c0_33 = arith.constant 0 : index
    %34 = vector.load %arg10[%c0_31, %c0_32, %c0_33] : memref<1x1x128xf32, #tpu.memory_space<vmem>>, vector<1x1x128xf32>
    %35 = vector.shape_cast %34 : vector<1x1x128xf32> to vector<1x128xf32>
    %36 = vector.broadcast %35 : vector<1x128xf32> to vector<8x128xf32>
    %37 = arith.addf %33, %36 : vector<8x128xf32>
    %c0_34 = arith.constant 0 : index
    %c0_35 = arith.constant 0 : index
    %c0_36 = arith.constant 0 : index
    %38 = vector.load %arg11[%c0_34, %c0_35, %c0_36] : memref<1x8x128xf32, #tpu.memory_space<vmem>>, vector<1x8x128xf32>
    %39 = vector.shape_cast %38 : vector<1x8x128xf32> to vector<8x128xf32>
    %40 = vector.shape_cast %37 : vector<8x128xf32> to vector<1x8x128xf32>
    tpu.vector_store %arg11[%c0_34, %c0_35, %c0_36], %40 {strides = array<i32>} : memref<1x8x128xf32, #tpu.memory_space<vmem>>, vector<1x8x128xf32>,
    return
  }
  func.func @transform_0(%arg0: i32, %arg1: i32) -> (i32, i32, i32) {
    %c0_i32 = arith.constant 0 : i32
    %c0_i32_0 = arith.constant 0 : i32
    return %arg0, %arg1, %c0_i32 : i32, i32, i32
  }
  func.func @transform_1(%arg0: i32, %arg1: i32) -> (i32, i32) {
    %c0_i32 = arith.constant 0 : i32
    %c0_i32_0 = arith.constant 0 : i32
    return %arg1, %c0_i32 : i32, i32
  }
  func.func @transform_2(%arg0: i32, %arg1: i32) -> (i32, i32, i32) {
    %c0_i32 = arith.constant 0 : i32
    %c0_i32_0 = arith.constant 0 : i32
    %c0_i32_1 = arith.constant 0 : i32
    return %arg0, %c0_i32, %c0_i32_0 : i32, i32, i32
  }
  func.func @transform_3(%arg0: i32, %arg1: i32) -> (i32, i32, i32) {
    %c0_i32 = arith.constant 0 : i32
    %c0_i32_0 = arith.constant 0 : i32
    %c0_i32_1 = arith.constant 0 : i32
    return %arg0, %c0_i32, %c0_i32_0 : i32, i32, i32
  }
  func.func @transform_4(%arg0: i32, %arg1: i32) -> (i32, i32, i32) {
    %c0_i32 = arith.constant 0 : i32
    %c0_i32_0 = arith.constant 0 : i32
    %c0_i32_1 = arith.constant 0 : i32
    return %arg0, %c0_i32, %c0_i32_0 : i32, i32, i32
  }
  func.func @transform_5(%arg0: i32, %arg1: i32) -> (i32, i32, i32, i32) {
    %c0_i32 = arith.constant 0 : i32
    %c0_i32_0 = arith.constant 0 : i32
    %c0_i32_1 = arith.constant 0 : i32
    %c0_i32_2 = arith.constant 0 : i32
    return %arg0, %c0_i32, %c0_i32_0, %c0_i32_1 : i32, i32, i32, i32
  }
  func.func @transform_6(%arg0: i32, %arg1: i32) -> (i32, i32, i32, i32) {
    %c0_i32 = arith.constant 0 : i32
    %c0_i32_0 = arith.constant 0 : i32
    %c0_i32_1 = arith.constant 0 : i32
    %c0_i32_2 = arith.constant 0 : i32
    return %arg0, %c0_i32, %c0_i32_0, %c0_i32_1 : i32, i32, i32, i32
  }
  func.func @transform_7(%arg0: i32, %arg1: i32) -> (i32, i32, i32) {
    %c0_i32 = arith.constant 0 : i32
    %c0_i32_0 = arith.constant 0 : i32
    %c0_i32_1 = arith.constant 0 : i32
    return %arg0, %c0_i32, %c0_i32_0 : i32, i32, i32
  }
  func.func @transform_8(%arg0: i32, %arg1: i32) -> (i32, i32, i32) {
    %c0_i32 = arith.constant 0 : i32
    %c0_i32_0 = arith.constant 0 : i32
    %c0_i32_1 = arith.constant 0 : i32
    return %arg0, %c0_i32, %c0_i32_0 : i32, i32, i32
  }
  func.func @transform_9(%arg0: i32, %arg1: i32) -> (i32, i32, i32) {
    %c0_i32 = arith.constant 0 : i32
    %c0_i32_0 = arith.constant 0 : i32
    return %arg0, %arg1, %c0_i32 : i32, i32, i32
  }
}

</mosaic_0001>

<llo_original>
// kernel: tpu_custom_call.1
$region0: #{tpu_custom_call.1}
  #allocation0 [shape = 'u32[]', space=smem, size = 0x4, offset = 0x4, fixed_abs, tag = 'smem constant byte address 0x4 - core index']
  #allocation1 [shape = 'u32[144,128]{1,0:T(1,128)}', space=vmem, size = 0x12000, scoped, tag = 'internal scratch']
  %s0 = inlined_call_operand.hbm [shape: f32[7,8,128], index: 0, kind: input, shape index: {}]
  %s1 = inlined_call_operand.hbm [shape: f32[8,8], index: 1, kind: input, shape index: {}]
  %s2 = inlined_call_operand.hbm [shape: f32[7,128,128], index: 2, kind: input, shape index: {}]
  %s3 = inlined_call_operand.hbm [shape: f32[7,8,128], index: 3, kind: input, shape index: {}]
  %s4 = inlined_call_operand.vmem [shape: f32[7,1,128], index: 4, kind: input, shape index: {}]
  %s5 = inlined_call_operand.hbm [shape: f32[7,1,128,128], index: 5, kind: input, shape index: {}]
  %s6 = inlined_call_operand.vmem [shape: f32[7,1,1,128], index: 6, kind: input, shape index: {}]
  %s7 = inlined_call_operand.hbm [shape: f32[7,128,128], index: 7, kind: input, shape index: {}]
  %s8 = inlined_call_operand.vmem [shape: f32[7,1,128], index: 8, kind: input, shape index: {}]
  %s9 = inlined_call_operand.hbm [shape: f32[7,8,128], index: 9, kind: output, shape index: {}]
  %s10 = sld [smem:[#allocation0]]
  $region93: #{tpu_custom_call.1} parent=0
    _
  %s12 = ssub.s32 1, %s10
  %s13 = scalar_select 0, %s12, %s10
  $region1: #{tpu_custom_call.1} parent=0
    #allocation2 [shape = 'u8[8192]{0}', space=vmem, size = 0x2000, scoped, tag = 'input window, operand 0']
    #allocation3 [shape = 's32[2]{0}', space=sflag, size = 0x8, scoped, tag = 'scoped memory for tpu_custom_call.1']
    #allocation4 [shape = 's32[2]{0}', space=sflag, size = 0x8, scoped, tag = 'scoped memory for tpu_custom_call.1']
    #allocation5 [shape = 'u8[4096]{0}', space=vmem, size = 0x1000, scoped, tag = 'input window, operand 1, single buffered']
    #allocation6 [shape = 's32[1]{0}', space=sflag, size = 0x4, scoped, tag = 'scoped memory for tpu_custom_call.1']
    #allocation7 [shape = 'u8[131072]{0}', space=vmem, size = 0x20000, scoped, tag = 'input window, operand 2']
    #allocation8 [shape = 'u8[8192]{0}', space=vmem, size = 0x2000, scoped, tag = 'input window, operand 3']
    #allocation9 [shape = 'u8[131072]{0}', space=vmem, size = 0x20000, scoped, tag = 'input window, operand 5']
    #allocation10 [shape = 'u8[131072]{0}', space=vmem, size = 0x20000, scoped, tag = 'input window, operand 7']
    #allocation11 [shape = 'u8[8192]{0}', space=vmem, size = 0x2000, scoped, tag = 'output window, operand 0']
    %14 = vsyncpa [#allocation3], 0
    %s15 = scalar_lea.sflag [#allocation3], 1
    %16 = vsyncpa %s15, 0
    %17 = vsyncpa [#allocation6], 0
    %18 = vsyncpa [#allocation4], 0
    %s19 = scalar_lea.sflag [#allocation4], 1
    %20 = vsyncpa %s19, 0
    loop: start=0, step=1, limit=9
    $region2: #{tpu_custom_call.1} parent=1 // loop_pre_header
      _
    $region3: #{tpu_custom_call.1} parent=1 // loop_header
      %s22 = sphi 0, %s26
      %p23 = scmp.ge.s32.totalorder %s22, 9
      %s29 = sphi 0, %s41
      %s30 = sphi 0, %s37
      %s31 = sphi 0, %s29
      %s32 = sphi 0, %s30
      %s33 = sphi 0, %s31
      %s34 = sphi 0, %s32
      %s46 = sphi 0, %s48
      %s49 = sphi 0, %s46
      %s50 = sphi 0, %s49
      %s66 = sphi 0, %s50
      %s72 = sphi 0, %s74
      %s75 = sphi 0, %s72
      %s76 = sphi 0, %s75
      %s92 = sphi 0, %s76
      %s98 = sphi 0, %s100
      %s101 = sphi 0, %s98
      %s102 = sphi 0, %s101
      %s118 = sphi 0, %s102
      %s124 = sphi 0, %s126
      %s127 = sphi 0, %s124
      %s128 = sphi 0, %s127
      %s144 = sphi 0, %s128
      %s150 = sphi 0, %s152
      %s153 = sphi 0, %s150
      %s154 = sphi 0, %s153
      %s170 = sphi 0, %s154
      %s176 = sphi 0, %s178
      %s179 = sphi 0, %s176
      %s180 = sphi 0, %s179
      %s196 = sphi 0, %s180
      %s202 = sphi 0, %s204
      %s205 = sphi 0, %s202
      %s206 = sphi 0, %s205
      %s222 = sphi 0, %s206
      %s228 = sphi 0, %s230
      %s231 = sphi 0, %s228
      %s232 = sphi 0, %s231
      %s248 = sphi 0, %s232
      %s254 = sphi 0, %s256
      %s257 = sphi 0, %s254
      %s258 = sphi 0, %s257
      %s274 = sphi 0, %s258
      %s282 = sphi 0, %s284
      %s285 = sphi 0, %s282
      %s286 = sphi 0, %s285
      %s302 = sphi 0, %s286
    $region4: #{tpu_custom_call.1} parent=1 // loop_header_branch
      %25 = sbr.rel (%p23) target = $region8
    $region5: #{tpu_custom_call.1} parent=1 // loop_body
      %s27 = ssub.s32 %s22, 1
      %s28 = ssub.s32 %s22, 2
      %s35 = sadd.s32 1, %s30
      %p36 = scmp.ge.s32.totalorder %s35, 1
      %s37 = scalar_select %p36, 0, %s35
      %s38 = sadd.s32 1, %s29
      %s39 = scalar_select %p36, %s38, %s29
      %p40 = scmp.ge.s32.totalorder %s39, 7
      %s41 = scalar_select %p40, 0, %s39
      %s42 = ssub.s32 %s29, %s41
      %s43 = ssub.s32 %s30, %s37
      %s44 = sor.u32 %s42, %s43
      %p45 = scmp.eq.s32.totalorder %s44, 0
      %s47 = sadd.s32 %s46, 1
      %s48 = scalar_select %p45, %s46, %s47
      %p51 = pneg %p45
      %p52 = scmp.eq.s32.totalorder %s22, 6
      %p53 = por %p51, %p52
      %p54 = scmp.ne.s32.totalorder %s46, %s49
      %p55 = scmp.eq.s32.totalorder %s22, 0
      %p56 = por %p54, %p55
      %p57 = scmp.ne.s32.totalorder %s46, %s49
      %p58 = scmp.eq.s32.totalorder %s27, 6
      %p59 = por %p57, %p58
      %p60 = scmp.ne.s32.totalorder %s49, %s50
      %p61 = scmp.eq.s32.totalorder %s27, 0
      %p62 = por %p60, %p61
      %p63 = scmp.ne.s32.totalorder %s49, %s50
      %p64 = scmp.eq.s32.totalorder %s28, 6
      %p65 = por %p63, %p64
      %p67 = scmp.ne.s32.totalorder %s50, %s66
      %p68 = scmp.eq.s32.totalorder %s28, 0
      %p69 = por %p67, %p68
      %s70 = ssub.s32 %s30, %s37
      %p71 = scmp.eq.s32.totalorder %s70, 0
      %s73 = sadd.s32 %s72, 1
      %s74 = scalar_select %p71, %s72, %s73
      %p77 = pneg %p71
      %p78 = scmp.eq.s32.totalorder %s22, 6
      %p79 = por %p77, %p78
      %p80 = scmp.ne.s32.totalorder %s72, %s75
      %p81 = scmp.eq.s32.totalorder %s22, 0
      %p82 = por %p80, %p81
      %p83 = scmp.ne.s32.totalorder %s72, %s75
      %p84 = scmp.eq.s32.totalorder %s27, 6
      %p85 = por %p83, %p84
      %p86 = scmp.ne.s32.totalorder %s75, %s76
      %p87 = scmp.eq.s32.totalorder %s27, 0
      %p88 = por %p86, %p87
      %p89 = scmp.ne.s32.totalorder %s75, %s76
      %p90 = scmp.eq.s32.totalorder %s28, 6
      %p91 = por %p89, %p90
      %p93 = scmp.ne.s32.totalorder %s76, %s92
      %p94 = scmp.eq.s32.totalorder %s28, 0
      %p95 = por %p93, %p94
      %s96 = ssub.s32 %s29, %s41
      %p97 = scmp.eq.s32.totalorder %s96, 0
      %s99 = sadd.s32 %s98, 1
      %s100 = scalar_select %p97, %s98, %s99
      %p103 = pneg %p97
      %p104 = scmp.eq.s32.totalorder %s22, 6
      %p105 = por %p103, %p104
      %p106 = scmp.ne.s32.totalorder %s98, %s101
      %p107 = scmp.eq.s32.totalorder %s22, 0
      %p108 = por %p106, %p107
      %p109 = scmp.ne.s32.totalorder %s98, %s101
      %p110 = scmp.eq.s32.totalorder %s27, 6
      %p111 = por %p109, %p110
      %p112 = scmp.ne.s32.totalorder %s101, %s102
      %p113 = scmp.eq.s32.totalorder %s27, 0
      %p114 = por %p112, %p113
      %p115 = scmp.ne.s32.totalorder %s101, %s102
      %p116 = scmp.eq.s32.totalorder %s28, 6
      %p117 = por %p115, %p116
      %p119 = scmp.ne.s32.totalorder %s102, %s118
      %p120 = scmp.eq.s32.totalorder %s28, 0
      %p121 = por %p119, %p120
      %s122 = ssub.s32 %s29, %s41
      %p123 = scmp.eq.s32.totalorder %s122, 0
      %s125 = sadd.s32 %s124, 1
      %s126 = scalar_select %p123, %s124, %s125
      %p129 = pneg %p123
      %p130 = scmp.eq.s32.totalorder %s22, 6
      %p131 = por %p129, %p130
      %p132 = scmp.ne.s32.totalorder %s124, %s127
      %p133 = scmp.eq.s32.totalorder %s22, 0
      %p134 = por %p132, %p133
      %p135 = scmp.ne.s32.totalorder %s124, %s127
      %p136 = scmp.eq.s32.totalorder %s27, 6
      %p137 = por %p135, %p136
      %p138 = scmp.ne.s32.totalorder %s127, %s128
      %p139 = scmp.eq.s32.totalorder %s27, 0
      %p140 = por %p138, %p139
      %p141 = scmp.ne.s32.totalorder %s127, %s128
      %p142 = scmp.eq.s32.totalorder %s28, 6
      %p143 = por %p141, %p142
      %p145 = scmp.ne.s32.totalorder %s128, %s144
      %p146 = scmp.eq.s32.totalorder %s28, 0
      %p147 = por %p145, %p146
      %s148 = ssub.s32 %s29, %s41
      %p149 = scmp.eq.s32.totalorder %s148, 0
      %s151 = sadd.s32 %s150, 1
      %s152 = scalar_select %p149, %s150, %s151
      %p155 = pneg %p149
      %p156 = scmp.eq.s32.totalorder %s22, 6
      %p157 = por %p155, %p156
      %p158 = scmp.ne.s32.totalorder %s150, %s153
      %p159 = scmp.eq.s32.totalorder %s22, 0
      %p160 = por %p158, %p159
      %p161 = scmp.ne.s32.totalorder %s150, %s153
      %p162 = scmp.eq.s32.totalorder %s27, 6
      %p163 = por %p161, %p162
      %p164 = scmp.ne.s32.totalorder %s153, %s154
      %p165 = scmp.eq.s32.totalorder %s27, 0
      %p166 = por %p164, %p165
      %p167 = scmp.ne.s32.totalorder %s153, %s154
      %p168 = scmp.eq.s32.totalorder %s28, 6
      %p169 = por %p167, %p168
      %p171 = scmp.ne.s32.totalorder %s154, %s170
      %p172 = scmp.eq.s32.totalorder %s28, 0
      %p173 = por %p171, %p172
      %s174 = ssub.s32 %s29, %s41
      %p175 = scmp.eq.s32.totalorder %s174, 0
      %s177 = sadd.s32 %s176, 1
      %s178 = scalar_select %p175, %s176, %s177
      %p181 = pneg %p175
      %p182 = scmp.eq.s32.totalorder %s22, 6
      %p183 = por %p181, %p182
      %p184 = scmp.ne.s32.totalorder %s176, %s179
      %p185 = scmp.eq.s32.totalorder %s22, 0
      %p186 = por %p184, %p185
      %p187 = scmp.ne.s32.totalorder %s176, %s179
      %p188 = scmp.eq.s32.totalorder %s27, 6
      %p189 = por %p187, %p188
      %p190 = scmp.ne.s32.totalorder %s179, %s180
      %p191 = scmp.eq.s32.totalorder %s27, 0
      %p192 = por %p190, %p191
      %p193 = scmp.ne.s32.totalorder %s179, %s180
      %p194 = scmp.eq.s32.totalorder %s28, 6
      %p195 = por %p193, %p194
      %p197 = scmp.ne.s32.totalorder %s180, %s196
      %p198 = scmp.eq.s32.totalorder %s28, 0
      %p199 = por %p197, %p198
      %s200 = ssub.s32 %s29, %s41
      %p201 = scmp.eq.s32.totalorder %s200, 0
      %s203 = sadd.s32 %s202, 1
      %s204 = scalar_select %p201, %s202, %s203
      %p207 = pneg %p201
      %p208 = scmp.eq.s32.totalorder %s22, 6
      %p209 = por %p207, %p208
      %p210 = scmp.ne.s32.totalorder %s202, %s205
      %p211 = scmp.eq.s32.totalorder %s22, 0
      %p212 = por %p210, %p211
      %p213 = scmp.ne.s32.totalorder %s202, %s205
      %p214 = scmp.eq.s32.totalorder %s27, 6
      %p215 = por %p213, %p214
      %p216 = scmp.ne.s32.totalorder %s205, %s206
      %p217 = scmp.eq.s32.totalorder %s27, 0
      %p218 = por %p216, %p217
      %p219 = scmp.ne.s32.totalorder %s205, %s206
      %p220 = scmp.eq.s32.totalorder %s28, 6
      %p221 = por %p219, %p220
      %p223 = scmp.ne.s32.totalorder %s206, %s222
      %p224 = scmp.eq.s32.totalorder %s28, 0
      %p225 = por %p223, %p224
      %s226 = ssub.s32 %s29, %s41
      %p227 = scmp.eq.s32.totalorder %s226, 0
      %s229 = sadd.s32 %s228, 1
      %s230 = scalar_select %p227, %s228, %s229
      %p233 = pneg %p227
      %p234 = scmp.eq.s32.totalorder %s22, 6
      %p235 = por %p233, %p234
      %p236 = scmp.ne.s32.totalorder %s228, %s231
      %p237 = scmp.eq.s32.totalorder %s22, 0
      %p238 = por %p236, %p237
      %p239 = scmp.ne.s32.totalorder %s228, %s231
      %p240 = scmp.eq.s32.totalorder %s27, 6
      %p241 = por %p239, %p240
      %p242 = scmp.ne.s32.totalorder %s231, %s232
      %p243 = scmp.eq.s32.totalorder %s27, 0
      %p244 = por %p242, %p243
      %p245 = scmp.ne.s32.totalorder %s231, %s232
      %p246 = scmp.eq.s32.totalorder %s28, 6
      %p247 = por %p245, %p246
      %p249 = scmp.ne.s32.totalorder %s232, %s248
      %p250 = scmp.eq.s32.totalorder %s28, 0
      %p251 = por %p249, %p250
      %s252 = ssub.s32 %s29, %s41
      %p253 = scmp.eq.s32.totalorder %s252, 0
      %s255 = sadd.s32 %s254, 1
      %s256 = scalar_select %p253, %s254, %s255
      %p259 = pneg %p253
      %p260 = scmp.eq.s32.totalorder %s22, 6
      %p261 = por %p259, %p260
      %p262 = scmp.ne.s32.totalorder %s254, %s257
      %p263 = scmp.eq.s32.totalorder %s22, 0
      %p264 = por %p262, %p263
      %p265 = scmp.ne.s32.totalorder %s254, %s257
      %p266 = scmp.eq.s32.totalorder %s27, 6
      %p267 = por %p265, %p266
      %p268 = scmp.ne.s32.totalorder %s257, %s258
      %p269 = scmp.eq.s32.totalorder %s27, 0
      %p270 = por %p268, %p269
      %p271 = scmp.ne.s32.totalorder %s257, %s258
      %p272 = scmp.eq.s32.totalorder %s28, 6
      %p273 = por %p271, %p272
      %p275 = scmp.ne.s32.totalorder %s258, %s274
      %p276 = scmp.eq.s32.totalorder %s28, 0
      %p277 = por %p275, %p276
      %s278 = ssub.s32 %s29, %s41
      %s279 = ssub.s32 %s30, %s37
      %s280 = sor.u32 %s278, %s279
      %p281 = scmp.eq.s32.totalorder %s280, 0
      %s283 = sadd.s32 %s282, 1
      %s284 = scalar_select %p281, %s282, %s283
      %p287 = pneg %p281
      %p288 = scmp.eq.s32.totalorder %s22, 6
      %p289 = por %p287, %p288
      %p290 = scmp.ne.s32.totalorder %s282, %s285
      %p291 = scmp.eq.s32.totalorder %s22, 0
      %p292 = por %p290, %p291
      %p293 = scmp.ne.s32.totalorder %s282, %s285
      %p294 = scmp.eq.s32.totalorder %s27, 6
      %p295 = por %p293, %p294
      %p296 = scmp.ne.s32.totalorder %s285, %s286
      %p297 = scmp.eq.s32.totalorder %s27, 0
      %p298 = por %p296, %p297
      %p299 = scmp.ne.s32.totalorder %s285, %s286
      %p300 = scmp.eq.s32.totalorder %s28, 6
      %p301 = por %p299, %p300
      %p303 = scmp.ne.s32.totalorder %s286, %s302
      %p304 = scmp.eq.s32.totalorder %s28, 0
      %p305 = por %p303, %p304
      %p306 = scmp.le.s32.totalorder 1, %s22
      %p307 = scmp.lt.s32.totalorder %s22, 8
      %p308 = pnand %p306, %p307
      %p309 = pneg %p308
      // Predicated region
      $region9: #{tpu_custom_call.1} parent=5 // pred_check
        _
      $region10: #{tpu_custom_call.1} parent=5 // pred_check_branch
        %311 = sbr.rel (%p308) target = $region12
      $region11: #{tpu_custom_call.1} parent=5 // pred_region
        %s312 = ssub.s32 %s22, 1
        // Predicated region
        $region13: #{tpu_custom_call.1} parent=11 // pred_check
          %p313 = pneg %p88
        $region14: #{tpu_custom_call.1} parent=11 // pred_check_branch
          %315 = sbr.rel (%p313) target = $region16
        $region15: #{tpu_custom_call.1} parent=11 // pred_region
          %s317 = ssub.s32 128, 128
          %318 = vsyncadd [#allocation6], %s317
          %s319 = smul.addr %s32, 128
          %s320 = scalar_lea.hbm %s1, %s319
          %s322 = sshll.u32 [#allocation5], 4
          %s323 = int_to_ptr.vmem [resolvable:$true] %s322
          %325 = dma.hbm_to_vmem [thread:$0]  %s320, 128, %s323, [#allocation6]
        $region16: #{tpu_custom_call.1} parent=11 // pred_fallthru
          _
      $region12: #{tpu_custom_call.1} parent=5 // pred_fallthru
        _
      %p326 = scmp.lt.s32.totalorder %s22, 7
      // Predicated region
      $region17: #{tpu_custom_call.1} parent=5 // pred_check
        %p327 = pneg %p326
      $region18: #{tpu_custom_call.1} parent=5 // pred_check_branch
        %329 = sbr.rel (%p327) target = $region20
      $region19: #{tpu_custom_call.1} parent=5 // pred_region
        // Predicated region
        $region21: #{tpu_custom_call.1} parent=19 // pred_check
          %p330 = pneg %p56
        $region22: #{tpu_custom_call.1} parent=19 // pred_check_branch
          %332 = sbr.rel (%p330) target = $region24
        $region23: #{tpu_custom_call.1} parent=19 // pred_region
          %s333 = sand.u32 %s22, 1
          %s334 = scalar_lea.sflag [#allocation3], %s333
          %s335 = sand.u32 %s46, 1
          %s336 = smul.addr %s335, 8
          %s337 = scalar_lea.vmem [#allocation2], %s336
          %s339 = ssub.s32 128, 128
          %340 = vsyncadd %s334, %s339
          %s341 = sadd.s32 %s30, %s29
          %s342 = smul.addr %s341, 128
          %s343 = scalar_lea.hbm %s0, %s342
          %s345 = sshll.u32 %s337, 4
          %s346 = int_to_ptr.vmem [resolvable:$true] %s345
          %348 = dma.hbm_to_vmem [thread:$0]  %s343, 128, %s346, %s334
        $region24: #{tpu_custom_call.1} parent=19 // pred_fallthru
          _
        // Predicated region
        $region25: #{tpu_custom_call.1} parent=19 // pred_check
          %p349 = pneg %p108
        $region26: #{tpu_custom_call.1} parent=19 // pred_check_branch
          %351 = sbr.rel (%p349) target = $region28
        $region27: #{tpu_custom_call.1} parent=19 // pred_region
          %s352 = sand.u32 %s22, 1
          %s353 = scalar_lea.sflag [#allocation3], %s352
          %s354 = sand.u32 %s98, 1
          %s355 = smul.addr %s354, 128
          %s356 = scalar_lea.vmem [#allocation7], %s355
          %s358 = ssub.s32 2048, 2048
          %359 = vsyncadd %s353, %s358
          %s360 = smul.addr %s29, 16
          %s361 = smul.addr %s360, 128
          %s362 = scalar_lea.hbm %s2, %s361
          %s363 = sshll.u32 %s356, 4
          %s364 = int_to_ptr.vmem [resolvable:$true] %s363
          %369 = dma.hbm_to_vmem [thread:$0]  %s362, 2048, %s364, %s353, 128, 128, 8
        $region28: #{tpu_custom_call.1} parent=19 // pred_fallthru
          _
        // Predicated region
        $region29: #{tpu_custom_call.1} parent=19 // pred_check
          %p370 = pneg %p134
        $region30: #{tpu_custom_call.1} parent=19 // pred_check_branch
          %372 = sbr.rel (%p370) target = $region32
        $region31: #{tpu_custom_call.1} parent=19 // pred_region
          %s373 = sand.u32 %s22, 1
          %s374 = scalar_lea.sflag [#allocation3], %s373
          %s375 = sand.u32 %s124, 1
          %s376 = smul.addr %s375, 8
          %s377 = scalar_lea.vmem [#allocation8], %s376
          %s379 = ssub.s32 128, 128
          %380 = vsyncadd %s374, %s379
          %s381 = smul.addr %s29, 128
          %s382 = scalar_lea.hbm %s3, %s381
          %s384 = sshll.u32 %s377, 4
          %s385 = int_to_ptr.vmem [resolvable:$true] %s384
          %387 = dma.hbm_to_vmem [thread:$0]  %s382, 128, %s385, %s374
        $region32: #{tpu_custom_call.1} parent=19 // pred_fallthru
          _
        // Predicated region
        $region33: #{tpu_custom_call.1} parent=19 // pred_check
          %p388 = pneg %p160
        $region34: #{tpu_custom_call.1} parent=19 // pred_check_branch
          %390 = sbr.rel (%p388) target = $region36
        $region35: #{tpu_custom_call.1} parent=19 // pred_region
          %p391 = scmp.lt.s32.totalorder %s29, 6
          %s392 = scalar_select %p391, %s29, 6
          %s393 = scalar_lea.vmem %s4, %s392
        $region36: #{tpu_custom_call.1} parent=19 // pred_fallthru
          _
        // Predicated region
        $region37: #{tpu_custom_call.1} parent=19 // pred_check
          %p394 = pneg %p186
        $region38: #{tpu_custom_call.1} parent=19 // pred_check_branch
          %396 = sbr.rel (%p394) target = $region40
        $region39: #{tpu_custom_call.1} parent=19 // pred_region
          %s397 = sand.u32 %s22, 1
          %s398 = scalar_lea.sflag [#allocation3], %s397
          %s399 = sand.u32 %s176, 1
          %s400 = smul.addr %s399, 128
          %s401 = scalar_lea.vmem [#allocation9], %s400
          %s403 = ssub.s32 2048, 2048
          %404 = vsyncadd %s398, %s403
          %s405 = smul.addr %s29, 16
          %s406 = smul.addr %s405, 128
          %s407 = scalar_lea.hbm %s5, %s406
          %s408 = sshll.u32 %s401, 4
          %s409 = int_to_ptr.vmem [resolvable:$true] %s408
          %414 = dma.hbm_to_vmem [thread:$0]  %s407, 2048, %s409, %s398, 128, 128, 8
        $region40: #{tpu_custom_call.1} parent=19 // pred_fallthru
          _
        // Predicated region
        $region41: #{tpu_custom_call.1} parent=19 // pred_check
          %p415 = pneg %p212
        $region42: #{tpu_custom_call.1} parent=19 // pred_check_branch
          %417 = sbr.rel (%p415) target = $region44
        $region43: #{tpu_custom_call.1} parent=19 // pred_region
          %p418 = scmp.lt.s32.totalorder %s29, 6
          %s419 = scalar_select %p418, %s29, 6
          %s420 = scalar_lea.vmem %s6, %s419
        $region44: #{tpu_custom_call.1} parent=19 // pred_fallthru
          _
        // Predicated region
        $region45: #{tpu_custom_call.1} parent=19 // pred_check
          %p421 = pneg %p238
        $region46: #{tpu_custom_call.1} parent=19 // pred_check_branch
          %423 = sbr.rel (%p421) target = $region48
        $region47: #{tpu_custom_call.1} parent=19 // pred_region
          %s424 = sand.u32 %s22, 1
          %s425 = scalar_lea.sflag [#allocation3], %s424
          %s426 = sand.u32 %s228, 1
          %s427 = smul.addr %s426, 128
          %s428 = scalar_lea.vmem [#allocation10], %s427
          %s430 = ssub.s32 2048, 2048
          %431 = vsyncadd %s425, %s430
          %s432 = smul.addr %s29, 16
          %s433 = smul.addr %s432, 128
          %s434 = scalar_lea.hbm %s7, %s433
          %s435 = sshll.u32 %s428, 4
          %s436 = int_to_ptr.vmem [resolvable:$true] %s435
          %441 = dma.hbm_to_vmem [thread:$0]  %s434, 2048, %s436, %s425, 128, 128, 8
        $region48: #{tpu_custom_call.1} parent=19 // pred_fallthru
          _
        // Predicated region
        $region49: #{tpu_custom_call.1} parent=19 // pred_check
          %p442 = pneg %p264
        $region50: #{tpu_custom_call.1} parent=19 // pred_check_branch
          %444 = sbr.rel (%p442) target = $region52
        $region51: #{tpu_custom_call.1} parent=19 // pred_region
          %p445 = scmp.lt.s32.totalorder %s29, 6
          %s446 = scalar_select %p445, %s29, 6
          %s447 = scalar_lea.vmem %s8, %s446
        $region52: #{tpu_custom_call.1} parent=19 // pred_fallthru
          _
      $region20: #{tpu_custom_call.1} parent=5 // pred_fallthru
        _
      %p448 = scmp.le.s32.totalorder 1, %s22
      %p449 = scmp.lt.s32.totalorder %s22, 8
      %p450 = pnand %p448, %p449
      %p451 = pneg %p450
      // Predicated region
      $region53: #{tpu_custom_call.1} parent=5 // pred_check
        _
      $region54: #{tpu_custom_call.1} parent=5 // pred_check_branch
        %453 = sbr.rel (%p450) target = $region56
      $region55: #{tpu_custom_call.1} parent=5 // pred_region
        %s454 = ssub.s32 %s22, 1
        %s455 = sand.u32 %s27, 1
        %s456 = scalar_lea.sflag [#allocation3], %s455
        %s457 = sand.u32 %s49, 1
        %s458 = smul.addr %s457, 8
        %s459 = scalar_lea.vmem [#allocation2], %s458
        // Predicated region
        $region57: #{tpu_custom_call.1} parent=55 // pred_check
          %p460 = pneg %p62
        $region58: #{tpu_custom_call.1} parent=55 // pred_check_branch
          %462 = sbr.rel (%p460) target = $region60
        $region59: #{tpu_custom_call.1} parent=55 // pred_region
          %463 = dma.done %s456, 128
        $region60: #{tpu_custom_call.1} parent=55 // pred_fallthru
          _
        // Predicated region
        $region61: #{tpu_custom_call.1} parent=55 // pred_check
          %p464 = pneg %p88
        $region62: #{tpu_custom_call.1} parent=55 // pred_check_branch
          %466 = sbr.rel (%p464) target = $region64
        $region63: #{tpu_custom_call.1} parent=55 // pred_region
          %467 = dma.done [#allocation6], 128
        $region64: #{tpu_custom_call.1} parent=55 // pred_fallthru
          _
        %s468 = sand.u32 %s27, 1
        %s469 = scalar_lea.sflag [#allocation3], %s468
        %s470 = sand.u32 %s101, 1
        %s471 = smul.addr %s470, 128
        %s472 = scalar_lea.vmem [#allocation7], %s471
        // Predicated region
        $region65: #{tpu_custom_call.1} parent=55 // pred_check
          %p473 = pneg %p114
        $region66: #{tpu_custom_call.1} parent=55 // pred_check_branch
          %475 = sbr.rel (%p473) target = $region68
        $region67: #{tpu_custom_call.1} parent=55 // pred_region
          %476 = dma.done %s469, 2048
        $region68: #{tpu_custom_call.1} parent=55 // pred_fallthru
          _
        %s477 = sand.u32 %s27, 1
        %s478 = scalar_lea.sflag [#allocation3], %s477
        %s479 = sand.u32 %s127, 1
        %s480 = smul.addr %s479, 8
        %s481 = scalar_lea.vmem [#allocation8], %s480
        // Predicated region
        $region69: #{tpu_custom_call.1} parent=55 // pred_check
          %p482 = pneg %p140
        $region70: #{tpu_custom_call.1} parent=55 // pred_check_branch
          %484 = sbr.rel (%p482) target = $region72
        $region71: #{tpu_custom_call.1} parent=55 // pred_region
          %485 = dma.done %s478, 128
        $region72: #{tpu_custom_call.1} parent=55 // pred_fallthru
          _
        %s486 = sand.u32 %s27, 1
        %s487 = scalar_lea.sflag [#allocation3], %s486
        %s488 = sand.u32 %s179, 1
        %s489 = smul.addr %s488, 128
        %s490 = scalar_lea.vmem [#allocation9], %s489
        // Predicated region
        $region73: #{tpu_custom_call.1} parent=55 // pred_check
          %p491 = pneg %p192
        $region74: #{tpu_custom_call.1} parent=55 // pred_check_branch
          %493 = sbr.rel (%p491) target = $region76
        $region75: #{tpu_custom_call.1} parent=55 // pred_region
          %494 = dma.done %s487, 2048
        $region76: #{tpu_custom_call.1} parent=55 // pred_fallthru
          _
        %s495 = sand.u32 %s27, 1
        %s496 = scalar_lea.sflag [#allocation3], %s495
        %s497 = sand.u32 %s231, 1
        %s498 = smul.addr %s497, 128
        %s499 = scalar_lea.vmem [#allocation10], %s498
        // Predicated region
        $region77: #{tpu_custom_call.1} parent=55 // pred_check
          %p500 = pneg %p244
        $region78: #{tpu_custom_call.1} parent=55 // pred_check_branch
          %502 = sbr.rel (%p500) target = $region80
        $region79: #{tpu_custom_call.1} parent=55 // pred_region
          %503 = dma.done %s496, 2048
        $region80: #{tpu_custom_call.1} parent=55 // pred_fallthru
          _
        %s504 = sand.u32 %s27, 1
        %s505 = scalar_lea.sflag [#allocation3], %s504
        %s506 = sand.u32 %s49, 1
        %s507 = smul.addr %s506, 8
        %s508 = scalar_lea.vmem [#allocation2], %s507
        %p509 = pneg %p62
        %p510 = pneg %p59
        %p511 = pneg %p88
        %p512 = pneg %p85
        %s513 = sand.u32 %s27, 1
        %s514 = scalar_lea.sflag [#allocation3], %s513
        %s515 = sand.u32 %s101, 1
        %s516 = smul.addr %s515, 128
        %s517 = scalar_lea.vmem [#allocation7], %s516
        %p518 = pneg %p114
        %p519 = pneg %p111
        %s520 = sand.u32 %s27, 1
        %s521 = scalar_lea.sflag [#allocation3], %s520
        %s522 = sand.u32 %s127, 1
        %s523 = smul.addr %s522, 8
        %s524 = scalar_lea.vmem [#allocation8], %s523
        %p525 = pneg %p140
        %p526 = pneg %p137
        %p527 = scmp.lt.s32.totalorder %s31, 6
        %s528 = scalar_select %p527, %s31, 6
        %s529 = scalar_lea.vmem %s4, %s528
        %p530 = pneg %p166
        %p531 = pneg %p163
        %s532 = sand.u32 %s27, 1
        %s533 = scalar_lea.sflag [#allocation3], %s532
        %s534 = sand.u32 %s179, 1
        %s535 = smul.addr %s534, 128
        %s536 = scalar_lea.vmem [#allocation9], %s535
        %p537 = pneg %p192
        %p538 = pneg %p189
        %p539 = scmp.lt.s32.totalorder %s31, 6
        %s540 = scalar_select %p539, %s31, 6
        %s541 = scalar_lea.vmem %s6, %s540
        %p542 = pneg %p218
        %p543 = pneg %p215
        %s544 = sand.u32 %s27, 1
        %s545 = scalar_lea.sflag [#allocation3], %s544
        %s546 = sand.u32 %s231, 1
        %s547 = smul.addr %s546, 128
        %s548 = scalar_lea.vmem [#allocation10], %s547
        %p549 = pneg %p244
        %p550 = pneg %p241
        %p551 = scmp.lt.s32.totalorder %s31, 6
        %s552 = scalar_select %p551, %s31, 6
        %s553 = scalar_lea.vmem %s8, %s552
        %p554 = pneg %p270
        %p555 = pneg %p267
        %p556 = pneg %p298
        %p557 = pneg %p295
        %s558 = sand.u32 %s285, 1
        %s559 = scalar_lea.sflag [#allocation4], %s558
        %s560 = sand.u32 %s285, 1
        %s561 = smul.addr %s560, 8
        %s562 = scalar_lea.vmem [#allocation11], %s561
        %p563 = scmp.lt.s32.totalorder %s31, 6
        %s564 = scalar_select %p563, %s31, 6
        %s565 = scalar_lea.vmem %s4, %s564
        %p566 = scmp.lt.s32.totalorder %s31, 6
        %s567 = scalar_select %p566, %s31, 6
        %s568 = scalar_lea.vmem %s6, %s567
        %p569 = scmp.lt.s32.totalorder %s31, 6
        %s570 = scalar_select %p569, %s31, 6
        %s571 = scalar_lea.vmem %s8, %s570
        %v572 = vld [vmem:[#allocation5] sm:$0xff]
        %v573 = vld [vmem:[%s481] sm:$0xff]
        %v574 = vld [vmem:[%s565] sm:$0x1]
        %v576 = vlaneseq
        %v577 = vshrl.u32 %v576, 7
        %v578 = vsub.s32 0, %v577
        %v579 = vrot.slane %v574, %v578
        %vm581 = vcmask 64512
        %v583 = vsel %vm581, %v572, 0
        %585 = vmatprep.subr.mxu0 0.0
        %586 = vmatpush1.msra.mxu0 %v573
        %587 = vmatprep.subr.mxu0 0.0
        %588 = vmatpush1.msra.mxu0 0.0
        %589 = vmatprep.subr.mxu0 0.0
        %590 = vmatpush1.msra.mxu0 0.0
        %591 = vmatprep.subr.mxu0 0.0
        %592 = vmatpush1.msra.mxu0 0.0
        %593 = vmatprep.subr.mxu0 0.0
        %594 = vmatpush1.msra.mxu0 0.0
        %595 = vmatprep.subr.mxu0 0.0
        %596 = vmatpush1.msra.mxu0 0.0
        %597 = vmatprep.subr.mxu0 0.0
        %598 = vmatpush1.msra.mxu0 0.0
        %599 = vmatprep.subr.mxu0 0.0
        %600 = vmatpush1.msra.mxu0 0.0
        %601 = vmatprep.subr.mxu0 0.0
        %602 = vmatpush1.msra.mxu0 0.0
        %603 = vmatprep.subr.mxu0 0.0
        %604 = vmatpush1.msra.mxu0 0.0
        %605 = vmatprep.subr.mxu0 0.0
        %606 = vmatpush1.msra.mxu0 0.0
        %607 = vmatprep.subr.mxu0 0.0
        %608 = vmatpush1.msra.mxu0 0.0
        %609 = vmatprep.subr.mxu0 0.0
        %610 = vmatpush1.msra.mxu0 0.0
        %611 = vmatprep.subr.mxu0 0.0
        %612 = vmatpush1.msra.mxu0 0.0
        %613 = vmatprep.subr.mxu0 0.0
        %614 = vmatpush1.msra.mxu0 0.0
        %615 = vmatprep.subr.mxu0 0.0
        %616 = vmatpush1.msra.mxu0 0.0
        %617 = vmatprep.subr.mxu0 0.0
        %618 = vmatpush1.msra.mxu0 0.0
        %619 = vmatprep.subr.mxu0 0.0
        %620 = vmatpush1.msra.mxu0 0.0
        %621 = vmatprep.subr.mxu0 0.0
        %622 = vmatpush1.msra.mxu0 0.0
        %623 = vmatprep.subr.mxu0 0.0
        %624 = vmatpush1.msra.mxu0 0.0
        %625 = vmatprep.subr.mxu0 0.0
        %626 = vmatpush1.msra.mxu0 0.0
        %627 = vmatprep.subr.mxu0 0.0
        %628 = vmatpush1.msra.mxu0 0.0
        %629 = vmatprep.subr.mxu0 0.0
        %630 = vmatpush1.msra.mxu0 0.0
        %631 = vmatprep.subr.mxu0 0.0
        %632 = vmatpush1.msra.mxu0 0.0
        %633 = vmatprep.subr.mxu0 0.0
        %634 = vmatpush1.msra.mxu0 0.0
        %635 = vmatprep.subr.mxu0 0.0
        %636 = vmatpush1.msra.mxu0 0.0
        %637 = vmatprep.subr.mxu0 0.0
        %638 = vmatpush1.msra.mxu0 0.0
        %639 = vmatprep.subr.mxu0 0.0
        %640 = vmatpush1.msra.mxu0 0.0
        %641 = vmatprep.subr.mxu0 0.0
        %642 = vmatpush1.msra.mxu0 0.0
        %643 = vmatprep.subr.mxu0 0.0
        %644 = vmatpush1.msra.mxu0 0.0
        %645 = vmatprep.subr.mxu0 0.0
        %646 = vmatpush1.msra.mxu0 0.0
        %647 = vmatprep.subr.mxu0 0.0
        %648 = vmatpush1.msra.mxu0 0.0
        %649 = vmatprep.mubr.f32.mxu0 0.0
        %650 = vmatmul.mubr.f32.gmra.mrb[0].mxu0 %v583
        %v651 = vpop.f32.mrb[0].mxu0
        %v652 = vadd.f32 %v579, %v651
        %v653 = vpop.f32.mrb[0].mxu0
        %654 = vdwg.mxu0
        %v655 = vld [vmem:[%s459] sm:$0xff]
        %v656 = vld [vmem:[%s472] sm:$0xff]
        %v657 = vld [vmem:[%s472 + $0x8] sm:$0xff]
        %v658 = vld [vmem:[%s472 + $0x10] sm:$0xff]
        %v659 = vld [vmem:[%s472 + $0x18] sm:$0xff]
        %v660 = vld [vmem:[%s472 + $0x20] sm:$0xff]
        %v661 = vld [vmem:[%s472 + $0x28] sm:$0xff]
        %v662 = vld [vmem:[%s472 + $0x30] sm:$0xff]
        %v663 = vld [vmem:[%s472 + $0x38] sm:$0xff]
        %v664 = vld [vmem:[%s472 + $0x40] sm:$0xff]
        %v665 = vld [vmem:[%s472 + $0x48] sm:$0xff]
        %v666 = vld [vmem:[%s472 + $0x50] sm:$0xff]
        %v667 = vld [vmem:[%s472 + $0x58] sm:$0xff]
        %v668 = vld [vmem:[%s472 + $0x60] sm:$0xff]
        %v669 = vld [vmem:[%s472 + $0x68] sm:$0xff]
        %v670 = vld [vmem:[%s472 + $0x70] sm:$0xff]
        %v671 = vld [vmem:[%s472 + $0x78] sm:$0xff]
        %672 = vmatprep.subr.mxu0 0.0
        %673 = vmatpush1.msra.mxu0 %v656
        %674 = vmatprep.subr.mxu0 0.0
        %675 = vmatpush1.msra.mxu0 %v657
        %676 = vmatprep.subr.mxu0 0.0
        %677 = vmatpush1.msra.mxu0 %v658
        %678 = vmatprep.subr.mxu0 0.0
        %679 = vmatpush1.msra.mxu0 %v659
        %680 = vmatprep.subr.mxu0 0.0
        %681 = vmatpush1.msra.mxu0 %v660
        %682 = vmatprep.subr.mxu0 0.0
        %683 = vmatpush1.msra.mxu0 %v661
        %684 = vmatprep.subr.mxu0 0.0
        %685 = vmatpush1.msra.mxu0 %v662
        %686 = vmatprep.subr.mxu0 0.0
        %687 = vmatpush1.msra.mxu0 %v663
        %688 = vmatprep.subr.mxu0 0.0
        %689 = vmatpush1.msra.mxu0 %v664
        %690 = vmatprep.subr.mxu0 0.0
        %691 = vmatpush1.msra.mxu0 %v665
        %692 = vmatprep.subr.mxu0 0.0
        %693 = vmatpush1.msra.mxu0 %v666
        %694 = vmatprep.subr.mxu0 0.0
        %695 = vmatpush1.msra.mxu0 %v667
        %696 = vmatprep.subr.mxu0 0.0
        %697 = vmatpush1.msra.mxu0 %v668
        %698 = vmatprep.subr.mxu0 0.0
        %699 = vmatpush1.msra.mxu0 %v669
        %700 = vmatprep.subr.mxu0 0.0
        %701 = vmatpush1.msra.mxu0 %v670
        %702 = vmatprep.subr.mxu0 0.0
        %703 = vmatpush1.msra.mxu0 %v671
        %704 = vmatprep.subr.mxu0 0.0
        %705 = vmatpush1.msra.mxu0 0.0
        %706 = vmatprep.subr.mxu0 0.0
        %707 = vmatpush1.msra.mxu0 0.0
        %708 = vmatprep.subr.mxu0 0.0
        %709 = vmatpush1.msra.mxu0 0.0
        %710 = vmatprep.subr.mxu0 0.0
        %711 = vmatpush1.msra.mxu0 0.0
        %712 = vmatprep.subr.mxu0 0.0
        %713 = vmatpush1.msra.mxu0 0.0
        %714 = vmatprep.subr.mxu0 0.0
        %715 = vmatpush1.msra.mxu0 0.0
        %716 = vmatprep.subr.mxu0 0.0
        %717 = vmatpush1.msra.mxu0 0.0
        %718 = vmatprep.subr.mxu0 0.0
        %719 = vmatpush1.msra.mxu0 0.0
        %720 = vmatprep.subr.mxu0 0.0
        %721 = vmatpush1.msra.mxu0 0.0
        %722 = vmatprep.subr.mxu0 0.0
        %723 = vmatpush1.msra.mxu0 0.0
        %724 = vmatprep.subr.mxu0 0.0
        %725 = vmatpush1.msra.mxu0 0.0
        %726 = vmatprep.subr.mxu0 0.0
        %727 = vmatpush1.msra.mxu0 0.0
        %728 = vmatprep.subr.mxu0 0.0
        %729 = vmatpush1.msra.mxu0 0.0
        %730 = vmatprep.subr.mxu0 0.0
        %731 = vmatpush1.msra.mxu0 0.0
        %732 = vmatprep.subr.mxu0 0.0
        %733 = vmatpush1.msra.mxu0 0.0
        %734 = vmatprep.subr.mxu0 0.0
        %735 = vmatpush1.msra.mxu0 0.0
        %736 = vmatprep.mubr.f32.mxu0 0.0
        %737 = vmatmul.mubr.f32.gmra.mrb[0].mxu0 %v655
        %v738 = vpop.f32.mrb[0].mxu0
        %v739 = vadd.f32 %v652, %v738
        %v740 = vpop.f32.mrb[0].mxu0
        %741 = vdwg.mxu0
        %vm742 = vcmp.ge.f32.partialorder %v739, 0.0
        %v743 = vmul.f32 %v739, 0.01
        %v744 = vsel %vm742, %v739, %v743
        %v745 = vld [vmem:[%s490] sm:$0xff]
        %v746 = vld [vmem:[%s490 + $0x8] sm:$0xff]
        %v747 = vld [vmem:[%s490 + $0x10] sm:$0xff]
        %v748 = vld [vmem:[%s490 + $0x18] sm:$0xff]
        %v749 = vld [vmem:[%s490 + $0x20] sm:$0xff]
        %v750 = vld [vmem:[%s490 + $0x28] sm:$0xff]
        %v751 = vld [vmem:[%s490 + $0x30] sm:$0xff]
        %v752 = vld [vmem:[%s490 + $0x38] sm:$0xff]
        %v753 = vld [vmem:[%s490 + $0x40] sm:$0xff]
        %v754 = vld [vmem:[%s490 + $0x48] sm:$0xff]
        %v755 = vld [vmem:[%s490 + $0x50] sm:$0xff]
        %v756 = vld [vmem:[%s490 + $0x58] sm:$0xff]
        %v757 = vld [vmem:[%s490 + $0x60] sm:$0xff]
        %v758 = vld [vmem:[%s490 + $0x68] sm:$0xff]
        %v759 = vld [vmem:[%s490 + $0x70] sm:$0xff]
        %v760 = vld [vmem:[%s490 + $0x78] sm:$0xff]
        %v761 = vld [vmem:[%s568] sm:$0x1]
        %v763 = vlaneseq
        %v764 = vshrl.u32 %v763, 7
        %v765 = vsub.s32 0, %v764
        %v766 = vrot.slane %v761, %v765
        %768 = vmatprep.subr.mxu0 0.0
        %769 = vmatpush1.msra.mxu0 %v745
        %770 = vmatprep.subr.mxu0 0.0
        %771 = vmatpush1.msra.mxu0 %v746
        %772 = vmatprep.subr.mxu0 0.0
        %773 = vmatpush1.msra.mxu0 %v747
        %774 = vmatprep.subr.mxu0 0.0
        %775 = vmatpush1.msra.mxu0 %v748
        %776 = vmatprep.subr.mxu0 0.0
        %777 = vmatpush1.msra.mxu0 %v749
        %778 = vmatprep.subr.mxu0 0.0
        %779 = vmatpush1.msra.mxu0 %v750
        %780 = vmatprep.subr.mxu0 0.0
        %781 = vmatpush1.msra.mxu0 %v751
        %782 = vmatprep.subr.mxu0 0.0
        %783 = vmatpush1.msra.mxu0 %v752
        %784 = vmatprep.subr.mxu0 0.0
        %785 = vmatpush1.msra.mxu0 %v753
        %786 = vmatprep.subr.mxu0 0.0
        %787 = vmatpush1.msra.mxu0 %v754
        %788 = vmatprep.subr.mxu0 0.0
        %789 = vmatpush1.msra.mxu0 %v755
        %790 = vmatprep.subr.mxu0 0.0
        %791 = vmatpush1.msra.mxu0 %v756
        %792 = vmatprep.subr.mxu0 0.0
        %793 = vmatpush1.msra.mxu0 %v757
        %794 = vmatprep.subr.mxu0 0.0
        %795 = vmatpush1.msra.mxu0 %v758
        %796 = vmatprep.subr.mxu0 0.0
        %797 = vmatpush1.msra.mxu0 %v759
        %798 = vmatprep.subr.mxu0 0.0
        %799 = vmatpush1.msra.mxu0 %v760
        %800 = vmatprep.subr.mxu0 0.0
        %801 = vmatpush1.msra.mxu0 0.0
        %802 = vmatprep.subr.mxu0 0.0
        %803 = vmatpush1.msra.mxu0 0.0
        %804 = vmatprep.subr.mxu0 0.0
        %805 = vmatpush1.msra.mxu0 0.0
        %806 = vmatprep.subr.mxu0 0.0
        %807 = vmatpush1.msra.mxu0 0.0
        %808 = vmatprep.subr.mxu0 0.0
        %809 = vmatpush1.msra.mxu0 0.0
        %810 = vmatprep.subr.mxu0 0.0
        %811 = vmatpush1.msra.mxu0 0.0
        %812 = vmatprep.subr.mxu0 0.0
        %813 = vmatpush1.msra.mxu0 0.0
        %814 = vmatprep.subr.mxu0 0.0
        %815 = vmatpush1.msra.mxu0 0.0
        %816 = vmatprep.subr.mxu0 0.0
        %817 = vmatpush1.msra.mxu0 0.0
        %818 = vmatprep.subr.mxu0 0.0
        %819 = vmatpush1.msra.mxu0 0.0
        %820 = vmatprep.subr.mxu0 0.0
        %821 = vmatpush1.msra.mxu0 0.0
        %822 = vmatprep.subr.mxu0 0.0
        %823 = vmatpush1.msra.mxu0 0.0
        %824 = vmatprep.subr.mxu0 0.0
        %825 = vmatpush1.msra.mxu0 0.0
        %826 = vmatprep.subr.mxu0 0.0
        %827 = vmatpush1.msra.mxu0 0.0
        %828 = vmatprep.subr.mxu0 0.0
        %829 = vmatpush1.msra.mxu0 0.0
        %830 = vmatprep.subr.mxu0 0.0
        %831 = vmatpush1.msra.mxu0 0.0
        %832 = vmatprep.mubr.f32.mxu0 0.0
        %833 = vmatmul.mubr.f32.gmra.mrb[0].mxu0 %v744
        %v834 = vpop.f32.mrb[0].mxu0
        %v835 = vadd.f32 %v766, %v834
        %v836 = vpop.f32.mrb[0].mxu0
        %837 = vdwg.mxu0
        %vm838 = vcmp.ge.f32.partialorder %v835, 0.0
        %v839 = vmul.f32 %v835, 0.01
        %v840 = vsel %vm838, %v835, %v839
        %v841 = vld [vmem:[%s499] sm:$0xff]
        %v842 = vld [vmem:[%s499 + $0x8] sm:$0xff]
        %v843 = vld [vmem:[%s499 + $0x10] sm:$0xff]
        %v844 = vld [vmem:[%s499 + $0x18] sm:$0xff]
        %v845 = vld [vmem:[%s499 + $0x20] sm:$0xff]
        %v846 = vld [vmem:[%s499 + $0x28] sm:$0xff]
        %v847 = vld [vmem:[%s499 + $0x30] sm:$0xff]
        %v848 = vld [vmem:[%s499 + $0x38] sm:$0xff]
        %v849 = vld [vmem:[%s499 + $0x40] sm:$0xff]
        %v850 = vld [vmem:[%s499 + $0x48] sm:$0xff]
        %v851 = vld [vmem:[%s499 + $0x50] sm:$0xff]
        %v852 = vld [vmem:[%s499 + $0x58] sm:$0xff]
        %v853 = vld [vmem:[%s499 + $0x60] sm:$0xff]
        %v854 = vld [vmem:[%s499 + $0x68] sm:$0xff]
        %v855 = vld [vmem:[%s499 + $0x70] sm:$0xff]
        %v856 = vld [vmem:[%s499 + $0x78] sm:$0xff]
        %v857 = vld [vmem:[%s571] sm:$0x1]
        %v859 = vlaneseq
        %v860 = vshrl.u32 %v859, 7
        %v861 = vsub.s32 0, %v860
        %v862 = vrot.slane %v857, %v861
        %864 = vmatprep.subr.mxu0 0.0
        %865 = vmatpush1.msra.mxu0 %v841
        %866 = vmatprep.subr.mxu0 0.0
        %867 = vmatpush1.msra.mxu0 %v842
        %868 = vmatprep.subr.mxu0 0.0
        %869 = vmatpush1.msra.mxu0 %v843
        %870 = vmatprep.subr.mxu0 0.0
        %871 = vmatpush1.msra.mxu0 %v844
        %872 = vmatprep.subr.mxu0 0.0
        %873 = vmatpush1.msra.mxu0 %v845
        %874 = vmatprep.subr.mxu0 0.0
        %875 = vmatpush1.msra.mxu0 %v846
        %876 = vmatprep.subr.mxu0 0.0
        %877 = vmatpush1.msra.mxu0 %v847
        %878 = vmatprep.subr.mxu0 0.0
        %879 = vmatpush1.msra.mxu0 %v848
        %880 = vmatprep.subr.mxu0 0.0
        %881 = vmatpush1.msra.mxu0 %v849
        %882 = vmatprep.subr.mxu0 0.0
        %883 = vmatpush1.msra.mxu0 %v850
        %884 = vmatprep.subr.mxu0 0.0
        %885 = vmatpush1.msra.mxu0 %v851
        %886 = vmatprep.subr.mxu0 0.0
        %887 = vmatpush1.msra.mxu0 %v852
        %888 = vmatprep.subr.mxu0 0.0
        %889 = vmatpush1.msra.mxu0 %v853
        %890 = vmatprep.subr.mxu0 0.0
        %891 = vmatpush1.msra.mxu0 %v854
        %892 = vmatprep.subr.mxu0 0.0
        %893 = vmatpush1.msra.mxu0 %v855
        %894 = vmatprep.subr.mxu0 0.0
        %895 = vmatpush1.msra.mxu0 %v856
        %896 = vmatprep.subr.mxu0 0.0
        %897 = vmatpush1.msra.mxu0 0.0
        %898 = vmatprep.subr.mxu0 0.0
        %899 = vmatpush1.msra.mxu0 0.0
        %900 = vmatprep.subr.mxu0 0.0
        %901 = vmatpush1.msra.mxu0 0.0
        %902 = vmatprep.subr.mxu0 0.0
        %903 = vmatpush1.msra.mxu0 0.0
        %904 = vmatprep.subr.mxu0 0.0
        %905 = vmatpush1.msra.mxu0 0.0
        %906 = vmatprep.subr.mxu0 0.0
        %907 = vmatpush1.msra.mxu0 0.0
        %908 = vmatprep.subr.mxu0 0.0
        %909 = vmatpush1.msra.mxu0 0.0
        %910 = vmatprep.subr.mxu0 0.0
        %911 = vmatpush1.msra.mxu0 0.0
        %912 = vmatprep.subr.mxu0 0.0
        %913 = vmatpush1.msra.mxu0 0.0
        %914 = vmatprep.subr.mxu0 0.0
        %915 = vmatpush1.msra.mxu0 0.0
        %916 = vmatprep.subr.mxu0 0.0
        %917 = vmatpush1.msra.mxu0 0.0
        %918 = vmatprep.subr.mxu0 0.0
        %919 = vmatpush1.msra.mxu0 0.0
        %920 = vmatprep.subr.mxu0 0.0
        %921 = vmatpush1.msra.mxu0 0.0
        %922 = vmatprep.subr.mxu0 0.0
        %923 = vmatpush1.msra.mxu0 0.0
        %924 = vmatprep.subr.mxu0 0.0
        %925 = vmatpush1.msra.mxu0 0.0
        %926 = vmatprep.subr.mxu0 0.0
        %927 = vmatpush1.msra.mxu0 0.0
        %928 = vmatprep.mubr.f32.mxu0 0.0
        %929 = vmatmul.mubr.f32.gmra.mrb[0].mxu0 %v840
        %v930 = vpop.f32.mrb[0].mxu0
        %v931 = vadd.f32 %v862, %v930
        %v932 = vpop.f32.mrb[0].mxu0
        %933 = vdwg.mxu0
        %934 = vst [vmem:[%s562] sm:$0xff] %v931
        %s935 = sand.u32 %s285, 1
        %s936 = scalar_lea.sflag [#allocation4], %s935
        %s937 = sand.u32 %s285, 1
        %s938 = smul.addr %s937, 8
        %s939 = scalar_lea.vmem [#allocation11], %s938
        // Predicated region
        $region81: #{tpu_custom_call.1} parent=55 // pred_check
          %p940 = pneg %p295
        $region82: #{tpu_custom_call.1} parent=55 // pred_check_branch
          %942 = sbr.rel (%p940) target = $region84
        $region83: #{tpu_custom_call.1} parent=55 // pred_region
          %s944 = ssub.s32 128, 128
          %945 = vsyncadd %s936, %s944
          %s946 = sadd.s32 %s32, %s31
          %s947 = smul.addr %s946, 128
          %s948 = scalar_lea.hbm %s9, %s947
          %s950 = sshll.u32 %s939, 4
          %s951 = int_to_ptr.vmem [resolvable:$true] %s950
          %953 = dma.vmem_to_hbm [thread:$0]  %s951, 128, %s948, %s936
        $region84: #{tpu_custom_call.1} parent=55 // pred_fallthru
          _
      $region56: #{tpu_custom_call.1} parent=5 // pred_fallthru
        _
      %p954 = scmp.le.s32.totalorder 2, %s22
      // Predicated region
      $region85: #{tpu_custom_call.1} parent=5 // pred_check
        %p955 = pneg %p954
      $region86: #{tpu_custom_call.1} parent=5 // pred_check_branch
        %957 = sbr.rel (%p955) target = $region88
      $region87: #{tpu_custom_call.1} parent=5 // pred_region
        %s958 = ssub.s32 %s22, 2
        // Predicated region
        $region89: #{tpu_custom_call.1} parent=87 // pred_check
          %p959 = pneg %p301
        $region90: #{tpu_custom_call.1} parent=87 // pred_check_branch
          %961 = sbr.rel (%p959) target = $region92
        $region91: #{tpu_custom_call.1} parent=87 // pred_region
          %s962 = sand.u32 %s286, 1
          %s963 = scalar_lea.sflag [#allocation4], %s962
          %s964 = sand.u32 %s286, 1
          %s965 = smul.addr %s964, 8
          %s966 = scalar_lea.vmem [#allocation11], %s965
          %967 = dma.done %s963, 128
        $region92: #{tpu_custom_call.1} parent=87 // pred_fallthru
          _
      $region88: #{tpu_custom_call.1} parent=5 // pred_fallthru
        _
    $region6: #{tpu_custom_call.1} parent=1 // loop_footer
      %s26 = sadd.s32 1, %s22
    $region7: #{tpu_custom_call.1} parent=1 // loop_footer_branch
      %21 = sbr.rel target = $region3
    $region8: #{tpu_custom_call.1} parent=1 // loop_exit
      _
    %968 = vsyncpa [#allocation3], 1
    %s969 = scalar_lea.sflag [#allocation3], 1
    %970 = vsyncpa %s969, 1
    %971 = vsyncpa [#allocation6], 1
    %972 = vsyncpa [#allocation4], 1
    %s973 = scalar_lea.sflag [#allocation4], 1
    %974 = vsyncpa %s973, 1

</llo_original>
